<compile_context>
chip_gen: v7x
topology: tpu7x:2x2x1
jax: 0.10.0
libtpu: 0.0.40
codegen_flags: <defaults>
</compile_context>

<pallas_src>
import functools

import jax
import jax.numpy as jnp
from jax.experimental import pallas as pl
from jax.experimental.pallas import tpu as pltpu


def _round_up(x, m):
    return (x + m - 1) // m * m


def _cdiv(a, b):
    return (a + b - 1) // b


def _vmem_capacity_bytes():
    try:
        info = pltpu.get_tpu_info()
        cap = getattr(info, "vmem_capacity_bytes", None)
        if cap:
            return int(cap)
    except Exception:
        pass
    return 128 << 20   # conservative fallback (v5e/v6e physical VMEM)


def _lm_head_topk_kernel(x_ref, g_ref, w_ref, maxv_ref, maxi_ref, xn_ref,
                         *, tn, tiles_per_shard, v_actual, covered, eps):
    """Grid: (vocab shard [parallel], M row-block [parallel], vocab tile [arbitrary]).

    x_ref   : (BM, H)  hidden-state row block
    g_ref   : (1, H)   RMSNorm gamma
    w_ref   : (TN, H)  lm_head weight tile (torch [V, H] layout, contiguous slab)
    maxv_ref: (BM, 1)  per-shard running max logit   (output, resident over j)
    maxi_ref: (BM, 1)  per-shard running argmax index (output, resident over j)
    xn_ref  : (BM, H)  scratch, normalized hidden states in input dtype
    """
    s = pl.program_id(0)
    j = pl.program_id(2)

    @pl.when(j == 0)
    def _():
        x = x_ref[...].astype(jnp.float32)
        var = jnp.mean(x * x, axis=-1, keepdims=True)
        # Qwen2RMSNorm: normed cast back to input dtype, then scaled by gamma.
        normed = (x * jax.lax.rsqrt(var + eps)).astype(x_ref.dtype)
        xn_ref[...] = (g_ref[...].astype(x_ref.dtype) * normed).astype(
            xn_ref.dtype)
        maxv_ref[...] = jnp.full(maxv_ref.shape, -jnp.inf, maxv_ref.dtype)
        maxi_ref[...] = jnp.zeros(maxi_ref.shape, maxi_ref.dtype)

    # (BM, H) x (TN, H)^T on the MXU, operands in their native dtype
    # (bf16 in deployment), f32 accumulation.
    logits = jax.lax.dot_general(
        xn_ref[...], w_ref[...],
        dimension_numbers=(((1,), (1,)), ((), ())),
        preferred_element_type=jnp.float32)                   # (BM, TN)

    col = jax.lax.broadcasted_iota(jnp.int32, (1, tn), 1)     # (1, TN)
    g_start = (s * tiles_per_shard + j) * tn                  # unclamped start

    if covered != v_actual:
        # Ragged / out-of-range vocab columns must never win the argmax.
        logits = jnp.where(col < (v_actual - g_start), logits, -jnp.inf)

    tile_max = jnp.max(logits, axis=-1, keepdims=True)        # (BM, 1)
    # Lowest index among ties within the tile (matches torch.topk k=1).
    tile_arg = jnp.min(jnp.where(logits == tile_max, col, tn),
                       axis=-1, keepdims=True) + g_start      # (BM, 1) int32

    better = tile_max > maxv_ref[...]   # strict > keeps earliest tile on ties
    maxi_ref[...] = jnp.where(better, tile_arg, maxi_ref[...])
    maxv_ref[...] = jnp.where(better, tile_max, maxv_ref[...])


def lm_head_with_topk(hidden_states, norm_weight, lm_head_w, *,
                      eps=1e-6, block_m=1024, block_v=2048, vocab_shards=2):
    """hidden_states: [B,S,H]; norm_weight: [H]; lm_head_w: [V,H] (torch layout)."""
    B, S, H = hidden_states.shape
    V, Hw = lm_head_w.shape
    assert Hw == H, (Hw, H)
    M = B * S

    x2d = hidden_states.reshape(M, H)
    g2d = norm_weight.reshape(1, H)
    w = lm_head_w                       # never padded / copied

    xb = x2d.dtype.itemsize
    gb = g2d.dtype.itemsize
    wb = w.dtype.itemsize

    vmem_cap = _vmem_capacity_bytes()
    vmem_budget = int(0.85 * vmem_cap)

    # Sublane multiple for the activation dtype (8 f32, 16 bf16, 32 int8).
    sub = max(8, 32 // max(xb, 1))
    bm = _round_up(min(block_m, _round_up(M, sub)), sub)

    # Vocab tile: lane-aligned; weight double-buffer capped at ~45% of VMEM.
    tn_cap = max(128, (int(0.45 * vmem_cap) // (2 * H * wb)) // 128 * 128)
    tn = max(128, min(_round_up(block_v, 128), tn_cap, _round_up(V, 128)))

    def _need(bm_, tn_):
        return (2 * bm_ * H * xb        # x row block (double-buffered)
                + 2 * H * gb            # gamma
                + 2 * tn_ * H * wb      # weight tile (double-buffered)
                + bm_ * H * xb          # xn scratch
                + 2 * bm_ * tn_ * 4     # logits + select temporaries (f32)
                + 4 * 2 * bm_ * 8       # maxv/maxi output blocks
                + (2 << 20))            # headroom

    while _need(bm, tn) > vmem_budget and bm > sub:
        bm = max(sub, _round_up(bm // 2, sub))
    vmem_limit = int(min(max(_need(bm, tn), 32 << 20), vmem_budget))

    Mp = _round_up(M, bm)
    if Mp != M:
        x2d = jnp.pad(x2d, ((0, Mp - M), (0, 0)))   # tiny vs. weight stream

    n_tiles = _cdiv(V, tn)
    n_shards = max(1, min(int(vocab_shards), n_tiles))
    tps = _cdiv(n_tiles, n_shards)          # vocab tiles per shard
    covered = n_shards * tps * tn           # vocab columns the grid sweeps

    if n_shards * tps > n_tiles:
        # Some shard tiles point past the last real tile: clamp the DMA to the
        # last valid tile; the in-kernel mask (covered > V) kills those lanes.
        def w_map(s, i, j):
            return (jnp.minimum(s * tps + j, n_tiles - 1), 0)
    else:
        def w_map(s, i, j):
            return (s * tps + j, 0)

    kernel = functools.partial(_lm_head_topk_kernel, tn=tn,
                               tiles_per_shard=tps, v_actual=V,
                               covered=covered, eps=eps)

    maxv, maxi = pl.pallas_call(
        kernel,
        out_shape=(jax.ShapeDtypeStruct((n_shards, Mp, 1), jnp.float32),
                   jax.ShapeDtypeStruct((n_shards, Mp, 1), jnp.int32)),
        grid_spec=pltpu.PrefetchScalarGridSpec(
            num_scalar_prefetch=0,
            grid=(n_shards, Mp // bm, tps),       # reduction (vocab tile) inner
            in_specs=[
                pl.BlockSpec((bm, H), lambda s, i, j: (i, 0)),   # hidden block
                pl.BlockSpec((1, H), lambda s, i, j: (0, 0)),    # rmsnorm gamma
                pl.BlockSpec((tn, H), w_map),                    # contiguous W tile
            ],
            out_specs=[
                pl.BlockSpec((None, bm, 1), lambda s, i, j: (s, i, 0)),
                pl.BlockSpec((None, bm, 1), lambda s, i, j: (s, i, 0)),
            ],
            scratch_shapes=[
                pltpu.VMEM((bm, H), x2d.dtype),   # normalized hidden (input dtype)
            ],
        ),
        compiler_params=pltpu.CompilerParams(
            dimension_semantics=("parallel", "parallel", "arbitrary"),
            vmem_limit_bytes=vmem_limit),
    )(x2d, g2d, w)

    if n_shards == 1:
        token = maxi[0]
    else:
        # Shards cover increasing vocab ranges; argmax's first-occurrence tie
        # break therefore picks the lowest global index (matches torch.topk).
        shard_sel = jnp.argmax(maxv, axis=0)                       # (Mp, 1)
        token = jnp.take_along_axis(maxi, shard_sel[None, ...], axis=0)[0]

    # torch.topk(m_logits.float(), 1) returns indices of shape [B, S, 1]
    return token[:M].reshape(B, S, 1)
    # TODO(synk): torch returns int64 indices; TPU kernel emits int32 (cast
    # outside if downstream consumers require int64).


def _reference(hidden_states, norm_weight, lm_head_w, eps=1e-6):
    x = hidden_states.astype(jnp.float32)
    var = jnp.mean(x * x, axis=-1, keepdims=True)
    xn = x * jax.lax.rsqrt(var + eps)
    xn = norm_weight.astype(jnp.float32) * xn
    logits = xn @ lm_head_w.astype(jnp.float32).T
    return jnp.argmax(logits, axis=-1, keepdims=True).astype(jnp.int32)


if __name__ == "__main__":
    # Small shapes; V deliberately not a multiple of the vocab tile and M not a
    # multiple of the row block so ragged-tile / masking / shard paths run.
    B, S, H, V = 2, 7, 128, 1000
    key = jax.random.PRNGKey(0)
    k1, k2, k3 = jax.random.split(key, 3)

    hidden_states = jax.random.normal(k1, (B, S, H), dtype=jnp.float32)
    norm_weight = 1.0 + 0.01 * jax.random.normal(k2, (H,), dtype=jnp.float32)
    lm_head_w = 0.02 * jax.random.normal(k3, (V, H), dtype=jnp.float32)  # [V, H]

    ref = _reference(hidden_states, norm_weight, lm_head_w)

    # (a) small tiles, 2 vocab shards, ragged last tile (1000 vs 4*256=1024).
    tok_a = jax.block_until_ready(
        lm_head_with_topk(hidden_states, norm_weight, lm_head_w,
                          block_m=8, block_v=256, vocab_shards=2))
    assert tok_a.shape == (B, S, 1), tok_a.shape
    assert jnp.array_equal(tok_a, ref), (tok_a.ravel(), ref.ravel())

    # (b) odd tile count (cdiv(1000, 384) = 3): exercises the clamped,
    #     fully-out-of-range tile of shard 1 plus the ragged tile mask.
    tok_b = jax.block_until_ready(
        lm_head_with_topk(hidden_states, norm_weight, lm_head_w,
                          block_m=8, block_v=384, vocab_shards=2))
    assert jnp.array_equal(tok_b, ref), (tok_b.ravel(), ref.ravel())

    # (c) defaults: single vocab tile -> single-shard fast path.
    tok_c = jax.block_until_ready(
        lm_head_with_topk(hidden_states, norm_weight, lm_head_w))
    assert jnp.array_equal(tok_c, ref), (tok_c.ravel(), ref.ravel())

    print("KERNEL_OK")
</pallas_src>

<mosaic_0001>
module attributes {stable_mosaic.version = 11 : i64} {
  func.func @_lm_head_topk_kernel(%arg0: i32, %arg1: i32, %arg2: i32, %arg3: memref<8x128xf32, #tpu.memory_space<vmem>>, %arg4: memref<1x128xf32, #tpu.memory_space<vmem>>, %arg5: memref<256x128xf32, #tpu.memory_space<vmem>>, %arg6: memref<1x8x1xf32, #tpu.memory_space<vmem>>, %arg7: memref<1x8x1xi32, #tpu.memory_space<vmem>>, %arg8: memref<8x128xf32, #tpu.memory_space<vmem>>) attributes {dimension_semantics = [#tpu.dimension_semantics<parallel>, #tpu.dimension_semantics<parallel>, #tpu.dimension_semantics<arbitrary>], iteration_bounds = array<i64: 2, 2, 2>, scalar_prefetch = 0 : i64, scratch_operands = 1 : i64, tpu.core_type = #tpu.core_type<tc>, window_params = [{transform_indices = @transform_0, window_bounds = array<i64: 8, 128>}, {pipeline_mode = #tpu.pipeline_mode<synchronous>, transform_indices = @transform_1, window_bounds = array<i64: 1, 128>}, {transform_indices = @transform_2, window_bounds = array<i64: 256, 128>}, {transform_indices = @transform_3, window_bounds = array<i64: 1, 8, 1>}, {transform_indices = @transform_4, window_bounds = array<i64: 1, 8, 1>}]} {
    %c0_i32 = arith.constant 0 : i32
    %0 = arith.cmpi eq, %arg2, %c0_i32 : i32
    %1 = arith.extui %0 : i1 to i32
    %c0_i32_0 = arith.constant 0 : i32
    %2 = arith.cmpi ne, %1, %c0_i32_0 : i32
    scf.if %2 {
      %c0_23 = arith.constant 0 : index
      %c0_24 = arith.constant 0 : index
      %44 = vector.load %arg3[%c0_23, %c0_24] : memref<8x128xf32, #tpu.memory_space<vmem>>, vector<8x128xf32>
      %45 = arith.mulf %44, %44 : vector<8x128xf32>
      %cst_25 = arith.constant dense<0.000000e+00> : vector<8xf32>
      %46 = vector.multi_reduction <add>, %45, %cst_25 [1] : vector<8x128xf32> to vector<8xf32>
      %47 = vector.shape_cast %46 : vector<8xf32> to vector<8x1xf32>
      %cst_26 = arith.constant 1.280000e+02 : f32
      %48 = vector.broadcast %cst_26 : f32 to vector<8x1xf32>
      %49 = arith.divf %47, %48 : vector<8x1xf32>
      %cst_27 = arith.constant 9.99999997E-7 : f32
      %50 = vector.broadcast %cst_27 : f32 to vector<8x1xf32>
      %51 = arith.addf %49, %50 : vector<8x1xf32>
      %52 = math.rsqrt %51 : vector<8x1xf32>
      %53 = vector.broadcast %52 : vector<8x1xf32> to vector<8x128xf32>
      %54 = arith.mulf %44, %53 : vector<8x128xf32>
      %c0_28 = arith.constant 0 : index
      %c0_29 = arith.constant 0 : index
      %55 = vector.load %arg4[%c0_28, %c0_29] : memref<1x128xf32, #tpu.memory_space<vmem>>, vector<1x128xf32>
      %56 = vector.broadcast %55 : vector<1x128xf32> to vector<8x128xf32>
      %57 = arith.mulf %56, %54 : vector<8x128xf32>
      %c0_30 = arith.constant 0 : index
      %c0_31 = arith.constant 0 : index
      %58 = vector.load %arg8[%c0_30, %c0_31] : memref<8x128xf32, #tpu.memory_space<vmem>>, vector<8x128xf32>
      tpu.vector_store %arg8[%c0_30, %c0_31], %57 {strides = array<i32>} : memref<8x128xf32, #tpu.memory_space<vmem>>, vector<8x128xf32>,
      %cst_32 = arith.constant 0xFF800000 : f32
      %59 = vector.broadcast %cst_32 : f32 to vector<8x1xf32>
      %c0_33 = arith.constant 0 : index
      %c0_34 = arith.constant 0 : index
      %c0_35 = arith.constant 0 : index
      %60 = vector.load %arg6[%c0_33, %c0_34, %c0_35] : memref<1x8x1xf32, #tpu.memory_space<vmem>>, vector<1x8x1xf32>
      %61 = vector.shape_cast %60 : vector<1x8x1xf32> to vector<8x1xf32>
      %62 = vector.shape_cast %59 : vector<8x1xf32> to vector<1x8x1xf32>
      tpu.vector_store %arg6[%c0_33, %c0_34, %c0_35], %62 {strides = array<i32>} : memref<1x8x1xf32, #tpu.memory_space<vmem>>, vector<1x8x1xf32>,
      %c0_i32_36 = arith.constant 0 : i32
      %63 = vector.broadcast %c0_i32_36 : i32 to vector<8x1xi32>
      %c0_37 = arith.constant 0 : index
      %c0_38 = arith.constant 0 : index
      %c0_39 = arith.constant 0 : index
      %64 = vector.load %arg7[%c0_37, %c0_38, %c0_39] : memref<1x8x1xi32, #tpu.memory_space<vmem>>, vector<1x8x1xi32>
      %65 = vector.shape_cast %64 : vector<1x8x1xi32> to vector<8x1xi32>
      %66 = vector.shape_cast %63 : vector<8x1xi32> to vector<1x8x1xi32>
      tpu.vector_store %arg7[%c0_37, %c0_38, %c0_39], %66 {strides = array<i32>} : memref<1x8x1xi32, #tpu.memory_space<vmem>>, vector<1x8x1xi32>,
    } else {
    }
    %c0 = arith.constant 0 : index
    %c0_1 = arith.constant 0 : index
    %3 = vector.load %arg8[%c0, %c0_1] : memref<8x128xf32, #tpu.memory_space<vmem>>, vector<8x128xf32>
    %c0_2 = arith.constant 0 : index
    %c0_3 = arith.constant 0 : index
    %4 = vector.load %arg5[%c0_2, %c0_3] : memref<256x128xf32, #tpu.memory_space<vmem>>, vector<256x128xf32>
    %cst = arith.constant dense<0.000000e+00> : vector<8x256xf32>
    %5 = tpu.matmul %3, %4, %cst {dimension_numbers = #tpu.dot_dimension_numbers<[1], [1], [0], [0], [0, 0, 1, 0], [], []>} : vector<8x128xf32>, vector<256x128xf32>, vector<8x256xf32> -> vector<8x256xf32>
    %6 = tpu.iota {dimensions = array<i32: 1>} : vector<1x256xi32>
    %c2_i32 = arith.constant 2 : i32
    %7 = arith.muli %arg0, %c2_i32 : i32
    %8 = arith.addi %7, %arg2 : i32
    %c256_i32 = arith.constant 256 : i32
    %9 = arith.muli %8, %c256_i32 : i32
    %c1000_i32 = arith.constant 1000 : i32
    %10 = arith.subi %c1000_i32, %9 : i32
    %11 = vector.broadcast %10 : i32 to vector<1x256xi32>
    %12 = arith.cmpi slt, %6, %11 : vector<1x256xi32>
    %cst_4 = arith.constant 0xFF800000 : f32
    %13 = vector.shape_cast %12 : vector<1x256xi1> to vector<1x256xi1>
    %14 = vector.broadcast %13 : vector<1x256xi1> to vector<8x256xi1>
    %15 = vector.broadcast %cst_4 : f32 to vector<8x256xf32>
    %16 = arith.select %14, %5, %15 : vector<8x256xi1>, vector<8x256xf32>
    %cst_5 = arith.constant dense<0xFF800000> : vector<8xf32>
    %17 = vector.multi_reduction <maximumf>, %16, %cst_5 [1] : vector<8x256xf32> to vector<8xf32>
    %18 = vector.shape_cast %17 : vector<8xf32> to vector<8x1xf32>
    %19 = vector.broadcast %18 : vector<8x1xf32> to vector<8x256xf32>
    %20 = arith.cmpf oeq, %16, %19 : vector<8x256xf32>
    %c256_i32_6 = arith.constant 256 : i32
    %21 = vector.shape_cast %6 : vector<1x256xi32> to vector<1x256xi32>
    %22 = vector.broadcast %21 : vector<1x256xi32> to vector<8x256xi32>
    %23 = vector.broadcast %c256_i32_6 : i32 to vector<8x256xi32>
    %24 = arith.select %20, %22, %23 : vector<8x256xi1>, vector<8x256xi32>
    %cst_7 = arith.constant dense<2147483647> : vector<8xi32>
    %25 = vector.multi_reduction <minsi>, %24, %cst_7 [1] : vector<8x256xi32> to vector<8xi32>
    %26 = vector.shape_cast %25 : vector<8xi32> to vector<8x1xi32>
    %27 = vector.broadcast %9 : i32 to vector<8x1xi32>
    %28 = arith.addi %26, %27 : vector<8x1xi32>
    %c0_8 = arith.constant 0 : index
    %c0_9 = arith.constant 0 : index
    %c0_10 = arith.constant 0 : index
    %29 = vector.load %arg6[%c0_8, %c0_9, %c0_10] : memref<1x8x1xf32, #tpu.memory_space<vmem>>, vector<1x8x1xf32>
    %30 = vector.shape_cast %29 : vector<1x8x1xf32> to vector<8x1xf32>
    %31 = arith.cmpf ogt, %18, %30 : vector<8x1xf32>
    %c0_11 = arith.constant 0 : index
    %c0_12 = arith.constant 0 : index
    %c0_13 = arith.constant 0 : index
    %32 = vector.load %arg7[%c0_11, %c0_12, %c0_13] : memref<1x8x1xi32, #tpu.memory_space<vmem>>, vector<1x8x1xi32>
    %33 = vector.shape_cast %32 : vector<1x8x1xi32> to vector<8x1xi32>
    %34 = arith.select %31, %28, %33 : vector<8x1xi1>, vector<8x1xi32>
    %c0_14 = arith.constant 0 : index
    %c0_15 = arith.constant 0 : index
    %c0_16 = arith.constant 0 : index
    %35 = vector.load %arg7[%c0_14, %c0_15, %c0_16] : memref<1x8x1xi32, #tpu.memory_space<vmem>>, vector<1x8x1xi32>
    %36 = vector.shape_cast %35 : vector<1x8x1xi32> to vector<8x1xi32>
    %37 = vector.shape_cast %34 : vector<8x1xi32> to vector<1x8x1xi32>
    tpu.vector_store %arg7[%c0_14, %c0_15, %c0_16], %37 {strides = array<i32>} : memref<1x8x1xi32, #tpu.memory_space<vmem>>, vector<1x8x1xi32>,
    %c0_17 = arith.constant 0 : index
    %c0_18 = arith.constant 0 : index
    %c0_19 = arith.constant 0 : index
    %38 = vector.load %arg6[%c0_17, %c0_18, %c0_19] : memref<1x8x1xf32, #tpu.memory_space<vmem>>, vector<1x8x1xf32>
    %39 = vector.shape_cast %38 : vector<1x8x1xf32> to vector<8x1xf32>
    %40 = arith.select %31, %18, %39 : vector<8x1xi1>, vector<8x1xf32>
    %c0_20 = arith.constant 0 : index
    %c0_21 = arith.constant 0 : index
    %c0_22 = arith.constant 0 : index
    %41 = vector.load %arg6[%c0_20, %c0_21, %c0_22] : memref<1x8x1xf32, #tpu.memory_space<vmem>>, vector<1x8x1xf32>
    %42 = vector.shape_cast %41 : vector<1x8x1xf32> to vector<8x1xf32>
    %43 = vector.shape_cast %40 : vector<8x1xf32> to vector<1x8x1xf32>
    tpu.vector_store %arg6[%c0_20, %c0_21, %c0_22], %43 {strides = array<i32>} : memref<1x8x1xf32, #tpu.memory_space<vmem>>, vector<1x8x1xf32>,
    return
  }
  func.func @transform_0(%arg0: i32, %arg1: i32, %arg2: i32) -> (i32, i32) {
    %c0_i32 = arith.constant 0 : i32
    %c0_i32_0 = arith.constant 0 : i32
    return %arg1, %c0_i32 : i32, i32
  }
  func.func @transform_1(%arg0: i32, %arg1: i32, %arg2: i32) -> (i32, i32) {
    %c0_i32 = arith.constant 0 : i32
    %c0_i32_0 = arith.constant 0 : i32
    %c0_i32_1 = arith.constant 0 : i32
    return %c0_i32, %c0_i32_0 : i32, i32
  }
  func.func @transform_2(%arg0: i32, %arg1: i32, %arg2: i32) -> (i32, i32) {
    %c2_i32 = arith.constant 2 : i32
    %0 = arith.muli %arg0, %c2_i32 : i32
    %1 = arith.addi %0, %arg2 : i32
    %c0_i32 = arith.constant 0 : i32
    %c0_i32_0 = arith.constant 0 : i32
    return %1, %c0_i32 : i32, i32
  }
  func.func @transform_3(%arg0: i32, %arg1: i32, %arg2: i32) -> (i32, i32, i32) {
    %c0_i32 = arith.constant 0 : i32
    %c0_i32_0 = arith.constant 0 : i32
    return %arg0, %arg1, %c0_i32 : i32, i32, i32
  }
  func.func @transform_4(%arg0: i32, %arg1: i32, %arg2: i32) -> (i32, i32, i32) {
    %c0_i32 = arith.constant 0 : i32
    %c0_i32_0 = arith.constant 0 : i32
    return %arg0, %arg1, %c0_i32 : i32, i32, i32
  }
}

</mosaic_0001>

<llo_original>
// kernel: tpu_custom_call.1
$region0: #{tpu_custom_call.1}
  #allocation0 [shape = 'u32[]', space=smem, size = 0x4, offset = 0x4, fixed_abs, tag = 'smem constant byte address 0x4 - core index']
  #allocation1 [shape = 'u32[144,128]{1,0:T(1,128)}', space=vmem, size = 0x12000, scoped, tag = 'internal scratch']
  #allocation2 [shape = 'f32[8,128]{1,0:T(8,128)}', space=vmem, size = 0x1000, scoped, tag = 'scratch operand']
  %s0 = inlined_call_operand.hbm [shape: f32[16,128], index: 0, kind: input, shape index: {}]
  %s1 = inlined_call_operand.vmem [shape: f32[1,128], index: 1, kind: input, shape index: {}]
  %s2 = inlined_call_operand.hbm [shape: f32[1000,128], index: 2, kind: input, shape index: {}]
  %s3 = inlined_call_operand.vmem [shape: f32[2,16,1], index: 3, kind: output, shape index: {0}]
  %s4 = inlined_call_operand.vmem [shape: s32[2,16,1], index: 4, kind: output, shape index: {1}]
  %5 = xla_tuple %s3, %s4
  %s6 = sld [smem:[#allocation0]]
  $region65: #{tpu_custom_call.1} parent=0
    _
  %s8 = ssub.s32 1, %s6
  %s9 = scalar_select 0, %s8, %s6
  $region1: #{tpu_custom_call.1} parent=0
    #allocation3 [shape = 'u8[8192]{0}', space=vmem, size = 0x2000, scoped, tag = 'input window, operand 0']
    #allocation4 [shape = 's32[2]{0}', space=sflag, size = 0x8, scoped, tag = 'scoped memory for tpu_custom_call.1']
    #allocation5 [shape = 'u8[262144]{0}', space=vmem, size = 0x40000, scoped, tag = 'input window, operand 2']
    #allocation6 [shape = 's32[2]{0}', space=sflag, size = 0x8, scoped, tag = 'scoped memory for tpu_custom_call.1']
    %10 = vsyncpa [#allocation4], 0
    %s11 = scalar_lea.sflag [#allocation4], 1
    %12 = vsyncpa %s11, 0
    %13 = vsyncpa [#allocation6], 0
    %s14 = scalar_lea.sflag [#allocation6], 1
    %15 = vsyncpa %s14, 0
    loop: start=0, step=1, limit=10
    $region2: #{tpu_custom_call.1} parent=1 // loop_pre_header
      _
    $region3: #{tpu_custom_call.1} parent=1 // loop_header
      %s17 = sphi 0, %s21
      %p18 = scmp.ge.s32.totalorder %s17, 10
      %s24 = sphi 0, %s43
      %s25 = sphi 0, %s39
      %s26 = sphi 0, %s35
      %s27 = sphi 0, %s24
      %s28 = sphi 0, %s25
      %s29 = sphi 0, %s26
      %s30 = sphi 0, %s27
      %s31 = sphi 0, %s28
      %s32 = sphi 0, %s29
      %s46 = sphi 0, %s48
      %s49 = sphi 0, %s46
      %s50 = sphi 0, %s49
      %s66 = sphi 0, %s50
      %s70 = sphi 0, %s70
      %s72 = sphi 0, %s70
      %s73 = sphi 0, %s72
      %s87 = sphi 0, %s73
      %s97 = sphi 0, %s99
      %s100 = sphi 0, %s97
      %s101 = sphi 0, %s100
      %s117 = sphi 0, %s101
      %s125 = sphi 0, %s127
      %s128 = sphi 0, %s125
      %s129 = sphi 0, %s128
      %s145 = sphi 0, %s129
      %s153 = sphi 0, %s155
      %s156 = sphi 0, %s153
      %s157 = sphi 0, %s156
      %s173 = sphi 0, %s157
    $region4: #{tpu_custom_call.1} parent=1 // loop_header_branch
      %20 = sbr.rel (%p18) target = $region8
    $region5: #{tpu_custom_call.1} parent=1 // loop_body
      %s22 = ssub.s32 %s17, 1
      %s23 = ssub.s32 %s17, 2
      %s33 = sadd.s32 1, %s26
      %p34 = scmp.ge.s32.totalorder %s33, 2
      %s35 = scalar_select %p34, 0, %s33
      %s36 = sadd.s32 1, %s25
      %s37 = scalar_select %p34, %s36, %s25
      %p38 = scmp.ge.s32.totalorder %s37, 2
      %s39 = scalar_select %p38, 0, %s37
      %s40 = sadd.s32 1, %s24
      %s41 = scalar_select %p38, %s40, %s24
      %p42 = scmp.ge.s32.totalorder %s41, 2
      %s43 = scalar_select %p42, 0, %s41
      %s44 = ssub.s32 %s25, %s39
      %p45 = scmp.eq.s32.totalorder %s44, 0
      %s47 = sadd.s32 %s46, 1
      %s48 = scalar_select %p45, %s46, %s47
      %p51 = pneg %p45
      %p52 = scmp.eq.s32.totalorder %s17, 7
      %p53 = por %p51, %p52
      %p54 = scmp.ne.s32.totalorder %s46, %s49
      %p55 = scmp.eq.s32.totalorder %s17, 0
      %p56 = por %p54, %p55
      %p57 = scmp.ne.s32.totalorder %s46, %s49
      %p58 = scmp.eq.s32.totalorder %s22, 7
      %p59 = por %p57, %p58
      %p60 = scmp.ne.s32.totalorder %s49, %s50
      %p61 = scmp.eq.s32.totalorder %s22, 0
      %p62 = por %p60, %p61
      %p63 = scmp.ne.s32.totalorder %s49, %s50
      %p64 = scmp.eq.s32.totalorder %s23, 7
      %p65 = por %p63, %p64
      %p67 = scmp.ne.s32.totalorder %s50, %s66
      %p68 = scmp.eq.s32.totalorder %s23, 0
      %p69 = por %p67, %p68
      %s71 = sadd.s32 %s70, 1
      %p74 = scmp.eq.s32.totalorder %s17, 7
      %p75 = scmp.ne.s32.totalorder %s70, %s72
      %p76 = scmp.eq.s32.totalorder %s17, 0
      %p77 = por %p75, %p76
      %p78 = scmp.ne.s32.totalorder %s70, %s72
      %p79 = scmp.eq.s32.totalorder %s22, 7
      %p80 = por %p78, %p79
      %p81 = scmp.ne.s32.totalorder %s72, %s73
      %p82 = scmp.eq.s32.totalorder %s22, 0
      %p83 = por %p81, %p82
      %p84 = scmp.ne.s32.totalorder %s72, %s73
      %p85 = scmp.eq.s32.totalorder %s23, 7
      %p86 = por %p84, %p85
      %p88 = scmp.ne.s32.totalorder %s73, %s87
      %p89 = scmp.eq.s32.totalorder %s23, 0
      %p90 = por %p88, %p89
      %s91 = smul.u32 %s24, 2
      %s92 = sadd.s32 %s91, %s26
      %s93 = smul.u32 %s43, 2
      %s94 = sadd.s32 %s93, %s35
      %s95 = ssub.s32 %s92, %s94
      %p96 = scmp.eq.s32.totalorder %s95, 0
      %s98 = sadd.s32 %s97, 1
      %s99 = scalar_select %p96, %s97, %s98
      %p102 = pneg %p96
      %p103 = scmp.eq.s32.totalorder %s17, 7
      %p104 = por %p102, %p103
      %p105 = scmp.ne.s32.totalorder %s97, %s100
      %p106 = scmp.eq.s32.totalorder %s17, 0
      %p107 = por %p105, %p106
      %p108 = scmp.ne.s32.totalorder %s97, %s100
      %p109 = scmp.eq.s32.totalorder %s22, 7
      %p110 = por %p108, %p109
      %p111 = scmp.ne.s32.totalorder %s100, %s101
      %p112 = scmp.eq.s32.totalorder %s22, 0
      %p113 = por %p111, %p112
      %p114 = scmp.ne.s32.totalorder %s100, %s101
      %p115 = scmp.eq.s32.totalorder %s23, 7
      %p116 = por %p114, %p115
      %p118 = scmp.ne.s32.totalorder %s101, %s117
      %p119 = scmp.eq.s32.totalorder %s23, 0
      %p120 = por %p118, %p119
      %s121 = ssub.s32 %s24, %s43
      %s122 = ssub.s32 %s25, %s39
      %s123 = sor.u32 %s121, %s122
      %p124 = scmp.eq.s32.totalorder %s123, 0
      %s126 = sadd.s32 %s125, 1
      %s127 = scalar_select %p124, %s125, %s126
      %p130 = pneg %p124
      %p131 = scmp.eq.s32.totalorder %s17, 7
      %p132 = por %p130, %p131
      %p133 = scmp.ne.s32.totalorder %s125, %s128
      %p134 = scmp.eq.s32.totalorder %s17, 0
      %p135 = por %p133, %p134
      %p136 = scmp.ne.s32.totalorder %s125, %s128
      %p137 = scmp.eq.s32.totalorder %s22, 7
      %p138 = por %p136, %p137
      %p139 = scmp.ne.s32.totalorder %s128, %s129
      %p140 = scmp.eq.s32.totalorder %s22, 0
      %p141 = por %p139, %p140
      %p142 = scmp.ne.s32.totalorder %s128, %s129
      %p143 = scmp.eq.s32.totalorder %s23, 7
      %p144 = por %p142, %p143
      %p146 = scmp.ne.s32.totalorder %s129, %s145
      %p147 = scmp.eq.s32.totalorder %s23, 0
      %p148 = por %p146, %p147
      %s149 = ssub.s32 %s24, %s43
      %s150 = ssub.s32 %s25, %s39
      %s151 = sor.u32 %s149, %s150
      %p152 = scmp.eq.s32.totalorder %s151, 0
      %s154 = sadd.s32 %s153, 1
      %s155 = scalar_select %p152, %s153, %s154
      %p158 = pneg %p152
      %p159 = scmp.eq.s32.totalorder %s17, 7
      %p160 = por %p158, %p159
      %p161 = scmp.ne.s32.totalorder %s153, %s156
      %p162 = scmp.eq.s32.totalorder %s17, 0
      %p163 = por %p161, %p162
      %p164 = scmp.ne.s32.totalorder %s153, %s156
      %p165 = scmp.eq.s32.totalorder %s22, 7
      %p166 = por %p164, %p165
      %p167 = scmp.ne.s32.totalorder %s156, %s157
      %p168 = scmp.eq.s32.totalorder %s22, 0
      %p169 = por %p167, %p168
      %p170 = scmp.ne.s32.totalorder %s156, %s157
      %p171 = scmp.eq.s32.totalorder %s23, 7
      %p172 = por %p170, %p171
      %p174 = scmp.ne.s32.totalorder %s157, %s173
      %p175 = scmp.eq.s32.totalorder %s23, 0
      %p176 = por %p174, %p175
      %p177 = scmp.le.s32.totalorder 1, %s17
      %p178 = scmp.lt.s32.totalorder %s17, 9
      %p179 = pnand %p177, %p178
      %p180 = pneg %p179
      // Predicated region
      $region9: #{tpu_custom_call.1} parent=5 // pred_check
        _
      $region10: #{tpu_custom_call.1} parent=5 // pred_check_branch
        %182 = sbr.rel (%p179) target = $region12
      $region11: #{tpu_custom_call.1} parent=5 // pred_region
        %s183 = ssub.s32 %s17, 1
        // Predicated region
        $region13: #{tpu_custom_call.1} parent=11 // pred_check
          %p184 = pneg %p83
        $region14: #{tpu_custom_call.1} parent=11 // pred_check_branch
          %186 = sbr.rel (%p184) target = $region16
        $region15: #{tpu_custom_call.1} parent=11 // pred_region
          _
        $region16: #{tpu_custom_call.1} parent=11 // pred_fallthru
          _
      $region12: #{tpu_custom_call.1} parent=5 // pred_fallthru
        _
      %p187 = scmp.lt.s32.totalorder %s17, 8
      // Predicated region
      $region17: #{tpu_custom_call.1} parent=5 // pred_check
        %p188 = pneg %p187
      $region18: #{tpu_custom_call.1} parent=5 // pred_check_branch
        %190 = sbr.rel (%p188) target = $region20
      $region19: #{tpu_custom_call.1} parent=5 // pred_region
        // Predicated region
        $region21: #{tpu_custom_call.1} parent=19 // pred_check
          %p191 = pneg %p56
        $region22: #{tpu_custom_call.1} parent=19 // pred_check_branch
          %193 = sbr.rel (%p191) target = $region24
        $region23: #{tpu_custom_call.1} parent=19 // pred_region
          %s194 = sand.u32 %s46, 1
          %s195 = scalar_lea.sflag [#allocation4], %s194
          %s196 = sand.u32 %s46, 1
          %s197 = smul.addr %s196, 8
          %s198 = scalar_lea.vmem [#allocation3], %s197
          %s200 = ssub.s32 128, 128
          %201 = vsyncadd %s195, %s200
          %s202 = smul.addr %s25, 128
          %s203 = scalar_lea.hbm %s0, %s202
          %s205 = sshll.u32 %s198, 4
          %s206 = int_to_ptr.vmem [resolvable:$true] %s205
          %208 = dma.hbm_to_vmem [thread:$0]  %s203, 128, %s206, %s195
        $region24: #{tpu_custom_call.1} parent=19 // pred_fallthru
          _
        // Predicated region
        $region25: #{tpu_custom_call.1} parent=19 // pred_check
          %p209 = pneg %p107
        $region26: #{tpu_custom_call.1} parent=19 // pred_check_branch
          %211 = sbr.rel (%p209) target = $region28
        $region27: #{tpu_custom_call.1} parent=19 // pred_region
          %s212 = sand.u32 %s97, 1
          %s213 = scalar_lea.sflag [#allocation6], %s212
          %s214 = sand.u32 %s97, 1
          %s215 = smul.addr %s214, 256
          %s216 = scalar_lea.vmem [#allocation5], %s215
          %s217 = smul.u32 %s24, 2
          %s218 = sadd.s32 %s217, %s26
          %s219 = smul.u32 32, %s218
          %s220 = ssub.s32 125, %s219
          %p221 = scmp.lt.s32.totalorder %s220, 32
          %s222 = scalar_select %p221, %s220, 32
          %s223 = smul.u32 128, %s222
          %s225 = ssub.s32 4096, %s223
          %226 = vsyncadd %s213, %s225
          %p227 = scmp.ne.s32.totalorder 0, %s223
          %s228 = smul.addr %s219, 128
          %s229 = scalar_lea.hbm %s2, %s228
          %s230 = smul.u32 8, %s222
          %s231 = sshll.u32 %s216, 4
          %s232 = int_to_ptr.vmem [resolvable:$true] %s231
          %s233 = sshll.u32 %s230, 4
          %237 = dma.hbm_to_vmem [thread:$0]  (%p227), %s229, %s233, %s232, %s213, 128, 128, 8
        $region28: #{tpu_custom_call.1} parent=19 // pred_fallthru
          _
      $region20: #{tpu_custom_call.1} parent=5 // pred_fallthru
        _
      %p238 = scmp.le.s32.totalorder 1, %s17
      %p239 = scmp.lt.s32.totalorder %s17, 9
      %p240 = pnand %p238, %p239
      %p241 = pneg %p240
      // Predicated region
      $region29: #{tpu_custom_call.1} parent=5 // pred_check
        _
      $region30: #{tpu_custom_call.1} parent=5 // pred_check_branch
        %243 = sbr.rel (%p240) target = $region32
      $region31: #{tpu_custom_call.1} parent=5 // pred_region
        %s244 = ssub.s32 %s17, 1
        %s245 = sand.u32 %s49, 1
        %s246 = scalar_lea.sflag [#allocation4], %s245
        %s247 = sand.u32 %s49, 1
        %s248 = smul.addr %s247, 8
        %s249 = scalar_lea.vmem [#allocation3], %s248
        // Predicated region
        $region33: #{tpu_custom_call.1} parent=31 // pred_check
          %p250 = pneg %p62
        $region34: #{tpu_custom_call.1} parent=31 // pred_check_branch
          %252 = sbr.rel (%p250) target = $region36
        $region35: #{tpu_custom_call.1} parent=31 // pred_region
          %253 = dma.done %s246, 128
        $region36: #{tpu_custom_call.1} parent=31 // pred_fallthru
          _
        %s254 = sand.u32 %s100, 1
        %s255 = scalar_lea.sflag [#allocation6], %s254
        %s256 = sand.u32 %s100, 1
        %s257 = smul.addr %s256, 256
        %s258 = scalar_lea.vmem [#allocation5], %s257
        // Predicated region
        $region37: #{tpu_custom_call.1} parent=31 // pred_check
          %p259 = pneg %p113
        $region38: #{tpu_custom_call.1} parent=31 // pred_check_branch
          %261 = sbr.rel (%p259) target = $region40
        $region39: #{tpu_custom_call.1} parent=31 // pred_region
          %262 = dma.done %s255, 4096
        $region40: #{tpu_custom_call.1} parent=31 // pred_fallthru
          _
        %s263 = sand.u32 %s49, 1
        %s264 = scalar_lea.sflag [#allocation4], %s263
        %s265 = sand.u32 %s49, 1
        %s266 = smul.addr %s265, 8
        %s267 = scalar_lea.vmem [#allocation3], %s266
        %p268 = pneg %p62
        %p269 = pneg %p59
        %p270 = pneg %p83
        %p271 = pneg %p80
        %s272 = sand.u32 %s100, 1
        %s273 = scalar_lea.sflag [#allocation6], %s272
        %s274 = sand.u32 %s100, 1
        %s275 = smul.addr %s274, 256
        %s276 = scalar_lea.vmem [#allocation5], %s275
        %p277 = pneg %p113
        %p278 = pneg %p110
        %p279 = pneg %p141
        %p280 = pneg %p138
        %p281 = scmp.lt.s32.totalorder %s27, 1
        %s282 = scalar_select %p281, %s27, 1
        %p283 = scmp.lt.s32.totalorder %s28, 1
        %s284 = scalar_select %p283, %s28, 1
        %s285 = smul.addr %s282, 2
        %s286 = sadd.s32 %s284, %s285
        %s287 = smul.addr %s286, 8
        %s288 = scalar_lea.vmem %s3, %s287
        %p289 = pneg %p169
        %p290 = pneg %p166
        %p291 = scmp.lt.s32.totalorder %s27, 1
        %s292 = scalar_select %p291, %s27, 1
        %p293 = scmp.lt.s32.totalorder %s28, 1
        %s294 = scalar_select %p293, %s28, 1
        %s295 = smul.addr %s292, 2
        %s296 = sadd.s32 %s294, %s295
        %s297 = smul.addr %s296, 8
        %s298 = scalar_lea.vmem %s4, %s297
        %s299 = smul.u32 %s27, 2
        %s300 = sadd.s32 %s299, %s29
        %s301 = smul.u32 32, %s300
        %s302 = ssub.s32 125, %s301
        %p303 = scmp.lt.s32.totalorder %s302, 32
        %s304 = scalar_select %p303, %s302, 32
        %s305 = smul.u32 128, %s304
        %p306 = scmp.lt.s32.totalorder %s27, 1
        %s307 = scalar_select %p306, %s27, 1
        %p308 = scmp.lt.s32.totalorder %s28, 1
        %s309 = scalar_select %p308, %s28, 1
        %s310 = smul.addr %s307, 2
        %s311 = sadd.s32 %s309, %s310
        %s312 = smul.addr %s311, 8
        %s313 = scalar_lea.vmem %s3, %s312
        %p314 = scmp.lt.s32.totalorder %s27, 1
        %s315 = scalar_select %p314, %s27, 1
        %p316 = scmp.lt.s32.totalorder %s28, 1
        %s317 = scalar_select %p316, %s28, 1
        %s318 = smul.addr %s315, 2
        %s319 = sadd.s32 %s317, %s318
        %s320 = smul.addr %s319, 8
        %s321 = scalar_lea.vmem %s4, %s320
        %p322 = scmp.eq.s32.totalorder %s29, 0
        // Predicated region
        $region41: #{tpu_custom_call.1} parent=31 // pred_check
          %p323 = pneg %p322
        $region42: #{tpu_custom_call.1} parent=31 // pred_check_branch
          %325 = sbr.rel (%p323) target = $region44
        $region43: #{tpu_custom_call.1} parent=31 // pred_region
          %v326 = vld [vmem:[%s249] sm:$0xff]
          %v327 = vmul.f32 %v326, %v326
          %328 = vadd.xlane.f32.xlu0 %v327
          %v329 = vpop.xlane.xlu0 %328
          %v330 = vrcp.pop 128.0
          %v331 = vmul.f32 %v329, %v330
          %v332 = vadd.f32 %v331, 1e-06
          %v333 = vrsqrt.pop %v332
          %v334 = vmul.f32 %v326, %v333
          %v335 = vld [vmem:[%s1] sm:$0x1]
          %v337 = vlaneseq
          %v338 = vshrl.u32 %v337, 7
          %v339 = vsub.s32 0, %v338
          %v340 = vrot.slane %v335, %v339
          %v342 = vmul.f32 %v340, %v334
          %343 = vst [vmem:[#allocation2] sm:$0xff] %v342
          %vm344 = vcmask 7168
          %345 = vst.msk [vmem:[%s313] sm:$0xff] %vm344, -inf
          %346 = vst.msk [vmem:[%s321] sm:$0xff] %vm344, 0
        $region44: #{tpu_custom_call.1} parent=31 // pred_fallthru
          _
        %v347 = vld [vmem:[#allocation2] sm:$0xff]
        %v348 = vld [vmem:[%s258] sm:$0xff]
        %v349 = vld [vmem:[%s258 + $0x8] sm:$0xff]
        %v350 = vld [vmem:[%s258 + $0x10] sm:$0xff]
        %v351 = vld [vmem:[%s258 + $0x18] sm:$0xff]
        %v352 = vld [vmem:[%s258 + $0x20] sm:$0xff]
        %v353 = vld [vmem:[%s258 + $0x28] sm:$0xff]
        %v354 = vld [vmem:[%s258 + $0x30] sm:$0xff]
        %v355 = vld [vmem:[%s258 + $0x38] sm:$0xff]
        %v356 = vld [vmem:[%s258 + $0x40] sm:$0xff]
        %v357 = vld [vmem:[%s258 + $0x48] sm:$0xff]
        %v358 = vld [vmem:[%s258 + $0x50] sm:$0xff]
        %v359 = vld [vmem:[%s258 + $0x58] sm:$0xff]
        %v360 = vld [vmem:[%s258 + $0x60] sm:$0xff]
        %v361 = vld [vmem:[%s258 + $0x68] sm:$0xff]
        %v362 = vld [vmem:[%s258 + $0x70] sm:$0xff]
        %v363 = vld [vmem:[%s258 + $0x78] sm:$0xff]
        %v364 = vld [vmem:[%s258 + $0x80] sm:$0xff]
        %v365 = vld [vmem:[%s258 + $0x88] sm:$0xff]
        %v366 = vld [vmem:[%s258 + $0x90] sm:$0xff]
        %v367 = vld [vmem:[%s258 + $0x98] sm:$0xff]
        %v368 = vld [vmem:[%s258 + $0xa0] sm:$0xff]
        %v369 = vld [vmem:[%s258 + $0xa8] sm:$0xff]
        %v370 = vld [vmem:[%s258 + $0xb0] sm:$0xff]
        %v371 = vld [vmem:[%s258 + $0xb8] sm:$0xff]
        %v372 = vld [vmem:[%s258 + $0xc0] sm:$0xff]
        %v373 = vld [vmem:[%s258 + $0xc8] sm:$0xff]
        %v374 = vld [vmem:[%s258 + $0xd0] sm:$0xff]
        %v375 = vld [vmem:[%s258 + $0xd8] sm:$0xff]
        %v376 = vld [vmem:[%s258 + $0xe0] sm:$0xff]
        %v377 = vld [vmem:[%s258 + $0xe8] sm:$0xff]
        %v378 = vld [vmem:[%s258 + $0xf0] sm:$0xff]
        %v379 = vld [vmem:[%s258 + $0xf8] sm:$0xff]
        %380 = vmatprep.subr.mxu0 0.0
        %381 = vmatpush1.xpose.msra.mxu0 %v348
        %382 = vmatprep.subr.mxu0 0.0
        %383 = vmatpush1.xpose.msra.mxu0 %v349
        %384 = vmatprep.subr.mxu0 0.0
        %385 = vmatpush1.xpose.msra.mxu0 %v350
        %386 = vmatprep.subr.mxu0 0.0
        %387 = vmatpush1.xpose.msra.mxu0 %v351
        %388 = vmatprep.subr.mxu0 0.0
        %389 = vmatpush1.xpose.msra.mxu0 %v352
        %390 = vmatprep.subr.mxu0 0.0
        %391 = vmatpush1.xpose.msra.mxu0 %v353
        %392 = vmatprep.subr.mxu0 0.0
        %393 = vmatpush1.xpose.msra.mxu0 %v354
        %394 = vmatprep.subr.mxu0 0.0
        %395 = vmatpush1.xpose.msra.mxu0 %v355
        %396 = vmatprep.subr.mxu0 0.0
        %397 = vmatpush1.xpose.msra.mxu0 %v356
        %398 = vmatprep.subr.mxu0 0.0
        %399 = vmatpush1.xpose.msra.mxu0 %v357
        %400 = vmatprep.subr.mxu0 0.0
        %401 = vmatpush1.xpose.msra.mxu0 %v358
        %402 = vmatprep.subr.mxu0 0.0
        %403 = vmatpush1.xpose.msra.mxu0 %v359
        %404 = vmatprep.subr.mxu0 0.0
        %405 = vmatpush1.xpose.msra.mxu0 %v360
        %406 = vmatprep.subr.mxu0 0.0
        %407 = vmatpush1.xpose.msra.mxu0 %v361
        %408 = vmatprep.subr.mxu0 0.0
        %409 = vmatpush1.xpose.msra.mxu0 %v362
        %410 = vmatprep.subr.mxu0 0.0
        %411 = vmatpush1.xpose.msra.mxu0 %v363
        %412 = vmatprep.subr.mxu0 0.0
        %413 = vmatpush1.xpose.msra.mxu0 %v364
        %414 = vmatprep.subr.mxu0 0.0
        %415 = vmatpush1.xpose.msra.mxu0 %v365
        %416 = vmatprep.subr.mxu0 0.0
        %417 = vmatpush1.xpose.msra.mxu0 %v366
        %418 = vmatprep.subr.mxu0 0.0
        %419 = vmatpush1.xpose.msra.mxu0 %v367
        %420 = vmatprep.subr.mxu0 0.0
        %421 = vmatpush1.xpose.msra.mxu0 %v368
        %422 = vmatprep.subr.mxu0 0.0
        %423 = vmatpush1.xpose.msra.mxu0 %v369
        %424 = vmatprep.subr.mxu0 0.0
        %425 = vmatpush1.xpose.msra.mxu0 %v370
        %426 = vmatprep.subr.mxu0 0.0
        %427 = vmatpush1.xpose.msra.mxu0 %v371
        %428 = vmatprep.subr.mxu0 0.0
        %429 = vmatpush1.xpose.msra.mxu0 %v372
        %430 = vmatprep.subr.mxu0 0.0
        %431 = vmatpush1.xpose.msra.mxu0 %v373
        %432 = vmatprep.subr.mxu0 0.0
        %433 = vmatpush1.xpose.msra.mxu0 %v374
        %434 = vmatprep.subr.mxu0 0.0
        %435 = vmatpush1.xpose.msra.mxu0 %v375
        %436 = vmatprep.subr.mxu0 0.0
        %437 = vmatpush1.xpose.msra.mxu0 %v376
        %438 = vmatprep.subr.mxu0 0.0
        %439 = vmatpush1.xpose.msra.mxu0 %v377
        %440 = vmatprep.subr.mxu0 0.0
        %441 = vmatpush1.xpose.msra.mxu0 %v378
        %442 = vmatprep.subr.mxu0 0.0
        %443 = vmatpush1.xpose.msra.mxu0 %v379
        %444 = vmatprep.mubr.f32.mxu0 0.0
        %445 = vmatmul.mubr.f32.gmra.mrb[0].mxu0 %v347
        %v446 = vpop.f32.mrb[0].mxu0
        %v447 = vadd.f32 0.0, %v446
        %v448 = vpop.f32.mrb[0].mxu0
        %v449 = vadd.f32 0.0, %v448
        %450 = vdwg.mxu0
        %v451 = vlaneseq
        %v452 = vand.u32 %v451, 127
        %v453 = vadd.s32 %v452, 128
        %s454 = smul.u32 %s27, 2
        %s455 = sadd.s32 %s454, %s29
        %s456 = smul.u32 %s455, 256
        %s457 = ssub.s32 1000, %s456
        %v458 = vstv %s457
        %vm459 = vcmp.lt.s32.totalorder %v452, %v458
        %vm460 = vcmp.lt.s32.totalorder %v453, %v458
        %v461 = vsel %vm459, 1, 0
        %v462 = vsel %vm460, 1, 0
        %vm463 = vcmp.eq.s32.totalorder %v461, 1
        %vm464 = vcmp.eq.s32.totalorder %v462, 1
        %v465 = vsel %vm463, %v447, -inf
        %v466 = vsel %vm464, %v449, -inf
        %v467 = vmax.f32 %v465, %v466
        %468 = vmax.xlane.f32.xlu0 %v467
        %v469 = vpop.xlane.xlu0 %468
        %vm470 = vcmp.eq.f32.partialorder %v465, %v469
        %vm471 = vcmp.eq.f32.partialorder %v466, %v469
        %v472 = vsel %vm470, %v452, 256
        %v473 = vsel %vm471, %v453, 256
        %vm474 = vcmp.lt.s32.totalorder %v472, %v473
        %v475 = vsel %vm474, %v472, %v473
        %v476 = vand.u32 %v475, 65535
        %v477 = vshra.s32 %v475, 16
        %v478 = vcvt.s32.f32 %v476
        %v479 = vcvt.s32.f32 %v477
        %480 = vmin.xlane.f32.xlu0 %v479
        %v481 = vpop.xlane.xlu0 %480
        %vm482 = vcmp.eq.f32.partialorder %v479, %v481
        %v483 = vsel %vm482, %v478, inf
        %484 = vmin.xlane.f32.xlu0 %v483
        %v485 = vpop.xlane.xlu0 %484
        %v486 = vcvt.f32.s32 %v485
        %v487 = vcvt.f32.s32 %v481
        %v488 = vshll.u32 %v487, 16
        %v489 = vadd.s32 %v488, %v486
        %v490 = vstv %s456
        %v491 = vadd.s32 %v489, %v490
        %v492 = vld [vmem:[%s313] sm:$0xff]
        %vm493 = vcmp.gt.f32.partialorder %v469, %v492
        %v494 = vld [vmem:[%s321] sm:$0xff]
        %v495 = vsel %vm493, %v491, %v494
        %vm496 = vcmask 7168
        %497 = vst.msk [vmem:[%s321] sm:$0xff] %vm496, %v495
        %v498 = vld [vmem:[%s313] sm:$0xff]
        %v499 = vsel %vm493, %v469, %v498
        %500 = vst.msk [vmem:[%s313] sm:$0xff] %vm496, %v499
        %p501 = scmp.lt.s32.totalorder %s27, 1
        %s502 = scalar_select %p501, %s27, 1
        %p503 = scmp.lt.s32.totalorder %s28, 1
        %s504 = scalar_select %p503, %s28, 1
        %s505 = smul.addr %s502, 2
        %s506 = sadd.s32 %s504, %s505
        %s507 = smul.addr %s506, 8
        %s508 = scalar_lea.vmem %s3, %s507
        %p509 = scmp.lt.s32.totalorder %s27, 1
        %s510 = scalar_select %p509, %s27, 1
        %p511 = scmp.lt.s32.totalorder %s28, 1
        %s512 = scalar_select %p511, %s28, 1
        %s513 = smul.addr %s510, 2
        %s514 = sadd.s32 %s512, %s513
        %s515 = smul.addr %s514, 8
        %s516 = scalar_lea.vmem %s4, %s515
        // Predicated region
        $region45: #{tpu_custom_call.1} parent=31 // pred_check
          %p517 = pneg %p138
        $region46: #{tpu_custom_call.1} parent=31 // pred_check_branch
          %519 = sbr.rel (%p517) target = $region48
        $region47: #{tpu_custom_call.1} parent=31 // pred_region
          _
        $region48: #{tpu_custom_call.1} parent=31 // pred_fallthru
          _
        // Predicated region
        $region49: #{tpu_custom_call.1} parent=31 // pred_check
          %p520 = pneg %p166
        $region50: #{tpu_custom_call.1} parent=31 // pred_check_branch
          %522 = sbr.rel (%p520) target = $region52
        $region51: #{tpu_custom_call.1} parent=31 // pred_region
          _
        $region52: #{tpu_custom_call.1} parent=31 // pred_fallthru
          _
      $region32: #{tpu_custom_call.1} parent=5 // pred_fallthru
        _
      %p523 = scmp.le.s32.totalorder 2, %s17
      // Predicated region
      $region53: #{tpu_custom_call.1} parent=5 // pred_check
        %p524 = pneg %p523
      $region54: #{tpu_custom_call.1} parent=5 // pred_check_branch
        %526 = sbr.rel (%p524) target = $region56
      $region55: #{tpu_custom_call.1} parent=5 // pred_region
        %s527 = ssub.s32 %s17, 2
        // Predicated region
        $region57: #{tpu_custom_call.1} parent=55 // pred_check
          %p528 = pneg %p144
        $region58: #{tpu_custom_call.1} parent=55 // pred_check_branch
          %530 = sbr.rel (%p528) target = $region60
        $region59: #{tpu_custom_call.1} parent=55 // pred_region
          %p531 = scmp.lt.s32.totalorder %s30, 1
          %s532 = scalar_select %p531, %s30, 1
          %p533 = scmp.lt.s32.totalorder %s31, 1
          %s534 = scalar_select %p533, %s31, 1
          %s535 = smul.addr %s532, 2
          %s536 = sadd.s32 %s534, %s535
          %s537 = smul.addr %s536, 8
          %s538 = scalar_lea.vmem %s3, %s537
        $region60: #{tpu_custom_call.1} parent=55 // pred_fallthru
          _
        // Predicated region
        $region61: #{tpu_custom_call.1} parent=55 // pred_check
          %p539 = pneg %p172
        $region62: #{tpu_custom_call.1} parent=55 // pred_check_branch
          %541 = sbr.rel (%p539) target = $region64
        $region63: #{tpu_custom_call.1} parent=55 // pred_region
          %p542 = scmp.lt.s32.totalorder %s30, 1
          %s543 = scalar_select %p542, %s30, 1
          %p544 = scmp.lt.s32.totalorder %s31, 1
          %s545 = scalar_select %p544, %s31, 1
          %s546 = smul.addr %s543, 2
          %s547 = sadd.s32 %s545, %s546
          %s548 = smul.addr %s547, 8
          %s549 = scalar_lea.vmem %s4, %s548
        $region64: #{tpu_custom_call.1} parent=55 // pred_fallthru
          _
      $region56: #{tpu_custom_call.1} parent=5 // pred_fallthru
        _
    $region6: #{tpu_custom_call.1} parent=1 // loop_footer
      %s21 = sadd.s32 1, %s17
    $region7: #{tpu_custom_call.1} parent=1 // loop_footer_branch
      %16 = sbr.rel target = $region3
    $region8: #{tpu_custom_call.1} parent=1 // loop_exit
      _
    %550 = vsyncpa [#allocation4], 1
    %s551 = scalar_lea.sflag [#allocation4], 1
    %552 = vsyncpa %s551, 1
    %553 = vsyncpa [#allocation6], 1
    %s554 = scalar_lea.sflag [#allocation6], 1
    %555 = vsyncpa %s554, 1

</llo_original>
